<compile_context>
chip_gen: v7x
topology: tpu7x:2x2x1
jax: 0.10.0
libtpu: 0.0.40
codegen_flags: <defaults>
</compile_context>

<pallas_src>
import functools
from typing import NamedTuple

import jax
import jax.numpy as jnp
from jax import lax
from jax.experimental import pallas as pl
from jax.experimental.pallas import tpu as pltpu


def _round_up(x: int, m: int) -> int:
    return (x + m - 1) // m * m


class GATParams(NamedTuple):
    wt: jax.Array    # [C, D_pad]  W transposed, zero-padded, MXU-input dtype
    bias: jax.Array  # [1, D_pad]  f32
    out_dim: int     # original D (to slice off the lane padding)


def prepare_gat_params(W, b, *, matmul_dtype=jnp.bfloat16, lane=128) -> GATParams:
    """One-time parameter prep (hoisted out of the per-step forward): transpose the
    nn.Linear weight [D, C] -> [C, D_pad], zero-pad D up to a multiple of 128 so the
    kernel's feature dim is lane dense, and cast to the MXU input dtype."""
    D, C = W.shape
    d_pad = _round_up(D, lane)
    wt = jnp.zeros((C, d_pad), jnp.float32).at[:, :D].set(W.T.astype(jnp.float32))
    bias = jnp.zeros((1, d_pad), jnp.float32).at[0, :D].set(b.astype(jnp.float32))
    return GATParams(wt=wt.astype(matmul_dtype), bias=bias, out_dim=D)


def _gat_kernel(x_ref, w_ref, g_ref, b_ref, o_ref, h_ref, *,
                tq, n_valid, matmul_dtype, approx_recip):
    # x_ref: (N_pad, C)       batch dim squeezed out
    # w_ref: (C, D_pad)
    # g_ref: (TQ, N_pad)      query-row tile of the adjacency
    # b_ref: (1, D_pad)
    # o_ref: (TQ, D_pad)      batch dim squeezed out
    # h_ref: (N_pad, D_pad)   VMEM scratch: resident h for the current batch element
    q = pl.program_id(1)
    n_pad = g_ref.shape[-1]

    # h = W(inputs): computed once per batch element (q == 0) and kept resident across
    # the query-tile axis instead of recomputing it per row tile.
    @pl.when(q == 0)
    def _():
        h_full = jnp.dot(x_ref[...].astype(matmul_dtype), w_ref[...],
                         preferred_element_type=jnp.float32)
        h_ref[...] = h_full.astype(h_ref.dtype)

    h = h_ref[...]                                            # (N_pad, D_pad)
    row0 = pl.multiple_of(q * tq, tq)
    h_q = h_ref[pl.ds(row0, tq), :]                           # (TQ, D_pad)

    # scores = h_q @ h^T: contract the last (lane) dim of both operands directly so
    # Mosaic drives the MXU without an explicit XLU transpose / relayout of h.
    s = lax.dot_general(h_q, h, dimension_numbers=(((1,), (1,)), ((), ())),
                        preferred_element_type=jnp.float32)   # (TQ, N_pad)

    # outputs = scores * graph; masked_fill_(outputs == 0, -1e16).
    # The multiply is kept (graph may carry edge weights) and the ==0 test is on the
    # product, matching torch.masked_fill_(torch.eq(outputs, 0), -1e16) exactly.
    s = s * g_ref[...]
    s = jnp.where(s == 0.0, jnp.float32(-1e16), s)

    if n_valid != n_pad:
        # Padded key columns get a value strictly below the -1e16 mask so rows with
        # no real edges still normalize over the N real nodes only.
        col = lax.broadcasted_iota(jnp.int32, s.shape, 1)
        s = jnp.where(col < n_valid, s, jnp.float32(-1e30))

    # Softmax over keys (torch dim=2), f32 throughout. The reciprocal goes to the
    # otherwise-idle EUP when approximate precision is acceptable (bf16 matmul path).
    m = jnp.max(s, axis=-1, keepdims=True)
    e = jnp.exp(s - m)
    attn = e * pl.reciprocal(jnp.sum(e, axis=-1, keepdims=True), approx=approx_recip)

    # out = attention @ h + b
    out = jnp.dot(attn.astype(matmul_dtype), h,
                  preferred_element_type=jnp.float32) + b_ref[...]
    o_ref[...] = out.astype(o_ref.dtype)


def graph_attention_layer(inputs, graph, params: GATParams):
    """inputs: [B, N, C]; graph: [N, N]; params from prepare_gat_params. -> [B, N, D]."""
    B, N, C = inputs.shape
    d_pad = params.wt.shape[1]
    mm_dtype = params.wt.dtype

    # Query-row tiling: TQ rows of scores/output per grid step. N is padded up to the
    # f32 sublane (8) for small graphs, or to a multiple of the 128-row tile for big
    # ones, which bounds VMEM to (TQ, N) scores + the resident (N, D_pad) h.
    # TODO(synk): for very large N also stream the key dimension (flash-style online
    # softmax) instead of holding full (TQ, N) score rows.
    if N >= 128:
        tq = 128
        n_pad = _round_up(N, tq)
    else:
        n_pad = _round_up(N, 8)
        tq = n_pad

    x = inputs.astype(mm_dtype)          # halves x DMA bytes on the bf16 path
    g = graph.astype(jnp.float32)
    if n_pad != N:
        x = jnp.pad(x, ((0, 0), (0, n_pad - N), (0, 0)))
        g = jnp.pad(g, ((0, n_pad - N), (0, n_pad - N)))

    kernel = functools.partial(
        _gat_kernel, tq=tq, n_valid=N, matmul_dtype=mm_dtype,
        approx_recip=bool(mm_dtype != jnp.float32))

    out = pl.pallas_call(
        kernel,
        out_shape=jax.ShapeDtypeStruct((B, n_pad, d_pad), jnp.float32),
        grid_spec=pltpu.PrefetchScalarGridSpec(
            num_scalar_prefetch=0,
            grid=(B, n_pad // tq),
            in_specs=[
                pl.BlockSpec((pl.Squeezed(), n_pad, C), lambda bb, qq: (bb, 0, 0)),
                pl.BlockSpec((C, d_pad), lambda bb, qq: (0, 0)),
                pl.BlockSpec((tq, n_pad), lambda bb, qq: (qq, 0)),
                pl.BlockSpec((1, d_pad), lambda bb, qq: (0, 0)),
            ],
            out_specs=pl.BlockSpec((pl.Squeezed(), tq, d_pad),
                                   lambda bb, qq: (bb, qq, 0)),
            scratch_shapes=[pltpu.VMEM((n_pad, d_pad), mm_dtype)],
        ),
        compiler_params=pltpu.CompilerParams(
            dimension_semantics=("parallel", "arbitrary")),
    )(x, params.wt, g, params.bias)

    # Slice off the lane / row padding (no-op when already aligned).
    return out[:, :N, :params.out_dim]


def _reference(inputs, W, b, graph):
    """Pure-JAX f32 reference matching the PyTorch module."""
    h = jnp.einsum("bnc,dc->bnd", inputs, W)
    s = jnp.einsum("bnd,bmd->bnm", h, h) * graph[None]
    s = jnp.where(s == 0.0, -1e16, s)
    attn = jax.nn.softmax(s, axis=2)
    return jnp.einsum("bnm,bmd->bnd", attn, h) + b


def _reference_matched(inputs, W, b, graph, matmul_dtype):
    """Reference using the same MXU input dtype as the kernel (f32 accumulation)."""
    x = inputs.astype(matmul_dtype)
    w = W.astype(matmul_dtype)
    h = jnp.einsum("bnc,dc->bnd", x, w, preferred_element_type=jnp.float32)
    hm = h.astype(matmul_dtype)
    s = jnp.einsum("bnd,bmd->bnm", hm, hm,
                   preferred_element_type=jnp.float32) * graph[None]
    s = jnp.where(s == 0.0, -1e16, s)
    attn = jax.nn.softmax(s, axis=2)
    return jnp.einsum("bnm,bmd->bnd", attn.astype(matmul_dtype), hm,
                      preferred_element_type=jnp.float32) + b


if __name__ == "__main__":
    B, N, C, D = 2, 8, 4, 32  # batch, nodes, in_c, out_c

    key = jax.random.PRNGKey(0)
    k_x, k_w, k_b, k_g = jax.random.split(key, 4)

    inputs = jax.random.normal(k_x, (B, N, C), dtype=jnp.float32)
    # Parameters: nn.init.normal_ on W ([out_c, in_c]) and b ([out_c]).
    W = jax.random.normal(k_w, (D, C), dtype=jnp.float32)
    b = jax.random.normal(k_b, (D,), dtype=jnp.float32)
    # Binary adjacency so the ==0 masking path is exercised.
    graph = (jax.random.uniform(k_g, (N, N)) > 0.5).astype(jnp.float32)

    # Exact path: f32 MXU inputs + exact reciprocal -> tight match vs f32 reference.
    params_f32 = prepare_gat_params(W, b, matmul_dtype=jnp.float32)
    out_f32 = jax.block_until_ready(graph_attention_layer(inputs, graph, params_f32))
    ref_f32 = _reference(inputs, W, b, graph)
    assert out_f32.shape == (B, N, D)
    assert jnp.allclose(out_f32, ref_f32, atol=1e-3, rtol=1e-3), "f32 kernel mismatch"

    # Performance path (default): bf16 MXU inputs (f32 accumulation, f32 softmax) and
    # the approximate (EUP) reciprocal. Validated against a bf16-matched reference
    # with the looser tolerance bf16 matmul inputs imply.
    params_bf16 = prepare_gat_params(W, b, matmul_dtype=jnp.bfloat16)
    out_bf16 = jax.block_until_ready(graph_attention_layer(inputs, graph, params_bf16))
    ref_bf16 = _reference_matched(inputs, W, b, graph, jnp.bfloat16)
    assert out_bf16.shape == (B, N, D)
    assert jnp.allclose(out_bf16, ref_bf16, atol=5e-2, rtol=5e-2), "bf16 kernel mismatch"

    print("KERNEL_OK")
</pallas_src>

<mosaic_0001>
module attributes {stable_mosaic.version = 11 : i64} {
  func.func @_gat_kernel(%arg0: i32, %arg1: i32, %arg2: memref<1x8x4xf32, #tpu.memory_space<vmem>>, %arg3: memref<4x128xf32, #tpu.memory_space<vmem>>, %arg4: memref<8x8xf32, #tpu.memory_space<vmem>>, %arg5: memref<1x128xf32, #tpu.memory_space<vmem>>, %arg6: memref<1x8x128xf32, #tpu.memory_space<vmem>>, %arg7: memref<8x128xf32, #tpu.memory_space<vmem>>) attributes {dimension_semantics = [#tpu.dimension_semantics<parallel>, #tpu.dimension_semantics<arbitrary>], iteration_bounds = array<i64: 2, 1>, scalar_prefetch = 0 : i64, scratch_operands = 1 : i64, tpu.core_type = #tpu.core_type<tc>, window_params = [{transform_indices = @transform_0, window_bounds = array<i64: 1, 8, 4>}, {pipeline_mode = #tpu.pipeline_mode<synchronous>, transform_indices = @transform_1, window_bounds = array<i64: 4, 128>}, {transform_indices = @transform_2, window_bounds = array<i64: 8, 8>}, {pipeline_mode = #tpu.pipeline_mode<synchronous>, transform_indices = @transform_3, window_bounds = array<i64: 1, 128>}, {transform_indices = @transform_4, window_bounds = array<i64: 1, 8, 128>}]} {
    %c0_i32 = arith.constant 0 : i32
    %0 = arith.cmpi eq, %arg1, %c0_i32 : i32
    %1 = arith.extui %0 : i1 to i32
    %c0_i32_0 = arith.constant 0 : i32
    %2 = arith.cmpi ne, %1, %c0_i32_0 : i32
    scf.if %2 {
      %c0_15 = arith.constant 0 : index
      %c0_16 = arith.constant 0 : index
      %c0_17 = arith.constant 0 : index
      %32 = vector.load %arg2[%c0_15, %c0_16, %c0_17] : memref<1x8x4xf32, #tpu.memory_space<vmem>>, vector<1x8x4xf32>
      %33 = vector.shape_cast %32 : vector<1x8x4xf32> to vector<8x4xf32>
      %c0_18 = arith.constant 0 : index
      %c0_19 = arith.constant 0 : index
      %34 = vector.load %arg3[%c0_18, %c0_19] : memref<4x128xf32, #tpu.memory_space<vmem>>, vector<4x128xf32>
      %cst_20 = arith.constant dense<0.000000e+00> : vector<8x128xf32>
      %35 = tpu.matmul %33, %34, %cst_20 {dimension_numbers = #tpu.dot_dimension_numbers<[1], [0], [0], [1], [0, 0, 1, 1], [], []>} : vector<8x4xf32>, vector<4x128xf32>, vector<8x128xf32> -> vector<8x128xf32>
      %c0_21 = arith.constant 0 : index
      %c0_22 = arith.constant 0 : index
      %36 = vector.load %arg7[%c0_21, %c0_22] : memref<8x128xf32, #tpu.memory_space<vmem>>, vector<8x128xf32>
      tpu.vector_store %arg7[%c0_21, %c0_22], %35 {strides = array<i32>} : memref<8x128xf32, #tpu.memory_space<vmem>>, vector<8x128xf32>,
    } else {
    }
    %c0 = arith.constant 0 : index
    %c0_1 = arith.constant 0 : index
    %3 = vector.load %arg7[%c0, %c0_1] : memref<8x128xf32, #tpu.memory_space<vmem>>, vector<8x128xf32>
    %c8_i32 = arith.constant 8 : i32
    %4 = arith.muli %arg1, %c8_i32 : i32
    %5 = tpu.assume_multiple %4, 8 : i32
    %6 = arith.index_cast %5 : i32 to index
    %c0_2 = arith.constant 0 : index
    %7 = vector.load %arg7[%6, %c0_2] : memref<8x128xf32, #tpu.memory_space<vmem>>, vector<8x128xf32>
    %cst = arith.constant dense<0.000000e+00> : vector<8x8xf32>
    %8 = tpu.matmul %7, %3, %cst {dimension_numbers = #tpu.dot_dimension_numbers<[1], [1], [0], [0], [0, 0, 1, 0], [], []>} : vector<8x128xf32>, vector<8x128xf32>, vector<8x8xf32> -> vector<8x8xf32>
    %c0_3 = arith.constant 0 : index
    %c0_4 = arith.constant 0 : index
    %9 = vector.load %arg4[%c0_3, %c0_4] : memref<8x8xf32, #tpu.memory_space<vmem>>, vector<8x8xf32>
    %10 = arith.mulf %8, %9 : vector<8x8xf32>
    %cst_5 = arith.constant 0.000000e+00 : f32
    %11 = vector.broadcast %cst_5 : f32 to vector<8x8xf32>
    %12 = arith.cmpf oeq, %10, %11 : vector<8x8xf32>
    %cst_6 = arith.constant -1.000000e+16 : f32
    %13 = vector.broadcast %cst_6 : f32 to vector<8x8xf32>
    %14 = arith.select %12, %13, %10 : vector<8x8xi1>, vector<8x8xf32>
    %cst_7 = arith.constant dense<0xFF800000> : vector<8xf32>
    %15 = vector.multi_reduction <maximumf>, %14, %cst_7 [1] : vector<8x8xf32> to vector<8xf32>
    %16 = vector.shape_cast %15 : vector<8xf32> to vector<8x1xf32>
    %17 = vector.broadcast %16 : vector<8x1xf32> to vector<8x8xf32>
    %18 = arith.subf %14, %17 : vector<8x8xf32>
    %19 = math.exp %18 : vector<8x8xf32>
    %cst_8 = arith.constant dense<0.000000e+00> : vector<8xf32>
    %20 = vector.multi_reduction <add>, %19, %cst_8 [1] : vector<8x8xf32> to vector<8xf32>
    %21 = vector.shape_cast %20 : vector<8xf32> to vector<8x1xf32>
    %22 = tpu.reciprocal %21 : vector<8x1xf32> -> vector<8x1xf32>
    %23 = vector.broadcast %22 : vector<8x1xf32> to vector<8x8xf32>
    %24 = arith.mulf %19, %23 : vector<8x8xf32>
    %cst_9 = arith.constant dense<0.000000e+00> : vector<8x128xf32>
    %25 = tpu.matmul %24, %3, %cst_9 {dimension_numbers = #tpu.dot_dimension_numbers<[1], [0], [0], [1], [0, 0, 1, 1], [], []>} : vector<8x8xf32>, vector<8x128xf32>, vector<8x128xf32> -> vector<8x128xf32>
    %c0_10 = arith.constant 0 : index
    %c0_11 = arith.constant 0 : index
    %26 = vector.load %arg5[%c0_10, %c0_11] : memref<1x128xf32, #tpu.memory_space<vmem>>, vector<1x128xf32>
    %27 = vector.broadcast %26 : vector<1x128xf32> to vector<8x128xf32>
    %28 = arith.addf %25, %27 : vector<8x128xf32>
    %c0_12 = arith.constant 0 : index
    %c0_13 = arith.constant 0 : index
    %c0_14 = arith.constant 0 : index
    %29 = vector.load %arg6[%c0_12, %c0_13, %c0_14] : memref<1x8x128xf32, #tpu.memory_space<vmem>>, vector<1x8x128xf32>
    %30 = vector.shape_cast %29 : vector<1x8x128xf32> to vector<8x128xf32>
    %31 = vector.shape_cast %28 : vector<8x128xf32> to vector<1x8x128xf32>
    tpu.vector_store %arg6[%c0_12, %c0_13, %c0_14], %31 {strides = array<i32>} : memref<1x8x128xf32, #tpu.memory_space<vmem>>, vector<1x8x128xf32>,
    return
  }
  func.func @transform_0(%arg0: i32, %arg1: i32) -> (i32, i32, i32) {
    %c0_i32 = arith.constant 0 : i32
    %c0_i32_0 = arith.constant 0 : i32
    %c0_i32_1 = arith.constant 0 : i32
    return %arg0, %c0_i32, %c0_i32_0 : i32, i32, i32
  }
  func.func @transform_1(%arg0: i32, %arg1: i32) -> (i32, i32) {
    %c0_i32 = arith.constant 0 : i32
    %c0_i32_0 = arith.constant 0 : i32
    %c0_i32_1 = arith.constant 0 : i32
    return %c0_i32, %c0_i32_0 : i32, i32
  }
  func.func @transform_2(%arg0: i32, %arg1: i32) -> (i32, i32) {
    %c0_i32 = arith.constant 0 : i32
    %c0_i32_0 = arith.constant 0 : i32
    return %arg1, %c0_i32 : i32, i32
  }
  func.func @transform_3(%arg0: i32, %arg1: i32) -> (i32, i32) {
    %c0_i32 = arith.constant 0 : i32
    %c0_i32_0 = arith.constant 0 : i32
    %c0_i32_1 = arith.constant 0 : i32
    return %c0_i32, %c0_i32_0 : i32, i32
  }
  func.func @transform_4(%arg0: i32, %arg1: i32) -> (i32, i32, i32) {
    %c0_i32 = arith.constant 0 : i32
    %c0_i32_0 = arith.constant 0 : i32
    return %arg0, %arg1, %c0_i32 : i32, i32, i32
  }
}

</mosaic_0001>

<llo_original>
// kernel: tpu_custom_call.1
$region0: #{tpu_custom_call.1}
  #allocation0 [shape = 'u32[]', space=smem, size = 0x4, offset = 0x4, fixed_abs, tag = 'smem constant byte address 0x4 - core index']
  #allocation1 [shape = 'u32[144,128]{1,0:T(1,128)}', space=vmem, size = 0x12000, scoped, tag = 'internal scratch']
  #allocation2 [shape = 'f32[8,128]{1,0:T(8,128)}', space=vmem, size = 0x1000, scoped, tag = 'scratch operand']
  %s0 = inlined_call_operand.vmem [shape: f32[2,8,4], index: 0, kind: input, shape index: {}]
  %s1 = inlined_call_operand.vmem [shape: f32[4,128], index: 1, kind: input, shape index: {}]
  %s2 = inlined_call_operand.vmem [shape: f32[8,8], index: 2, kind: input, shape index: {}]
  %s3 = inlined_call_operand.vmem [shape: f32[1,128], index: 3, kind: input, shape index: {}]
  %s4 = inlined_call_operand.hbm [shape: f32[2,8,128], index: 4, kind: output, shape index: {}]
  %s5 = sld [smem:[#allocation0]]
  $region53: #{tpu_custom_call.1} parent=0
    _
  %s7 = ssub.s32 1, %s5
  %s8 = scalar_select 0, %s7, %s5
  $region1: #{tpu_custom_call.1} parent=0
    #allocation3 [shape = 'u8[8192]{0}', space=vmem, size = 0x2000, scoped, tag = 'output window, operand 0']
    #allocation4 [shape = 's32[2]{0}', space=sflag, size = 0x8, scoped, tag = 'scoped memory for tpu_custom_call.1']
    %9 = vsyncpa [#allocation4], 0
    %s10 = scalar_lea.sflag [#allocation4], 1
    %11 = vsyncpa %s10, 0
    loop: start=0, step=1, limit=4
    $region2: #{tpu_custom_call.1} parent=1 // loop_pre_header
      _
    $region3: #{tpu_custom_call.1} parent=1 // loop_header
      %s13 = sphi 0, %s17
      %p14 = scmp.ge.s32.totalorder %s13, 4
      %s20 = sphi 0, %s32
      %s21 = sphi 0, %s28
      %s22 = sphi 0, %s20
      %s23 = sphi 0, %s21
      %s24 = sphi 0, %s22
      %s25 = sphi 0, %s23
      %s35 = sphi 0, %s37
      %s38 = sphi 0, %s35
      %s39 = sphi 0, %s38
      %s55 = sphi 0, %s39
      %s59 = sphi 0, %s59
      %s61 = sphi 0, %s59
      %s62 = sphi 0, %s61
      %s76 = sphi 0, %s62
      %s82 = sphi 0, %s84
      %s85 = sphi 0, %s82
      %s86 = sphi 0, %s85
      %s102 = sphi 0, %s86
      %s106 = sphi 0, %s106
      %s108 = sphi 0, %s106
      %s109 = sphi 0, %s108
      %s123 = sphi 0, %s109
      %s131 = sphi 0, %s133
      %s134 = sphi 0, %s131
      %s135 = sphi 0, %s134
      %s151 = sphi 0, %s135
    $region4: #{tpu_custom_call.1} parent=1 // loop_header_branch
      %16 = sbr.rel (%p14) target = $region8
    $region5: #{tpu_custom_call.1} parent=1 // loop_body
      %s18 = ssub.s32 %s13, 1
      %s19 = ssub.s32 %s13, 2
      %s26 = sadd.s32 1, %s21
      %p27 = scmp.ge.s32.totalorder %s26, 1
      %s28 = scalar_select %p27, 0, %s26
      %s29 = sadd.s32 1, %s20
      %s30 = scalar_select %p27, %s29, %s20
      %p31 = scmp.ge.s32.totalorder %s30, 2
      %s32 = scalar_select %p31, 0, %s30
      %s33 = ssub.s32 %s20, %s32
      %p34 = scmp.eq.s32.totalorder %s33, 0
      %s36 = sadd.s32 %s35, 1
      %s37 = scalar_select %p34, %s35, %s36
      %p40 = pneg %p34
      %p41 = scmp.eq.s32.totalorder %s13, 1
      %p42 = por %p40, %p41
      %p43 = scmp.ne.s32.totalorder %s35, %s38
      %p44 = scmp.eq.s32.totalorder %s13, 0
      %p45 = por %p43, %p44
      %p46 = scmp.ne.s32.totalorder %s35, %s38
      %p47 = scmp.eq.s32.totalorder %s18, 1
      %p48 = por %p46, %p47
      %p49 = scmp.ne.s32.totalorder %s38, %s39
      %p50 = scmp.eq.s32.totalorder %s18, 0
      %p51 = por %p49, %p50
      %p52 = scmp.ne.s32.totalorder %s38, %s39
      %p53 = scmp.eq.s32.totalorder %s19, 1
      %p54 = por %p52, %p53
      %p56 = scmp.ne.s32.totalorder %s39, %s55
      %p57 = scmp.eq.s32.totalorder %s19, 0
      %p58 = por %p56, %p57
      %s60 = sadd.s32 %s59, 1
      %p63 = scmp.eq.s32.totalorder %s13, 1
      %p64 = scmp.ne.s32.totalorder %s59, %s61
      %p65 = scmp.eq.s32.totalorder %s13, 0
      %p66 = por %p64, %p65
      %p67 = scmp.ne.s32.totalorder %s59, %s61
      %p68 = scmp.eq.s32.totalorder %s18, 1
      %p69 = por %p67, %p68
      %p70 = scmp.ne.s32.totalorder %s61, %s62
      %p71 = scmp.eq.s32.totalorder %s18, 0
      %p72 = por %p70, %p71
      %p73 = scmp.ne.s32.totalorder %s61, %s62
      %p74 = scmp.eq.s32.totalorder %s19, 1
      %p75 = por %p73, %p74
      %p77 = scmp.ne.s32.totalorder %s62, %s76
      %p78 = scmp.eq.s32.totalorder %s19, 0
      %p79 = por %p77, %p78
      %s80 = ssub.s32 %s21, %s28
      %p81 = scmp.eq.s32.totalorder %s80, 0
      %s83 = sadd.s32 %s82, 1
      %s84 = scalar_select %p81, %s82, %s83
      %p87 = pneg %p81
      %p88 = scmp.eq.s32.totalorder %s13, 1
      %p89 = por %p87, %p88
      %p90 = scmp.ne.s32.totalorder %s82, %s85
      %p91 = scmp.eq.s32.totalorder %s13, 0
      %p92 = por %p90, %p91
      %p93 = scmp.ne.s32.totalorder %s82, %s85
      %p94 = scmp.eq.s32.totalorder %s18, 1
      %p95 = por %p93, %p94
      %p96 = scmp.ne.s32.totalorder %s85, %s86
      %p97 = scmp.eq.s32.totalorder %s18, 0
      %p98 = por %p96, %p97
      %p99 = scmp.ne.s32.totalorder %s85, %s86
      %p100 = scmp.eq.s32.totalorder %s19, 1
      %p101 = por %p99, %p100
      %p103 = scmp.ne.s32.totalorder %s86, %s102
      %p104 = scmp.eq.s32.totalorder %s19, 0
      %p105 = por %p103, %p104
      %s107 = sadd.s32 %s106, 1
      %p110 = scmp.eq.s32.totalorder %s13, 1
      %p111 = scmp.ne.s32.totalorder %s106, %s108
      %p112 = scmp.eq.s32.totalorder %s13, 0
      %p113 = por %p111, %p112
      %p114 = scmp.ne.s32.totalorder %s106, %s108
      %p115 = scmp.eq.s32.totalorder %s18, 1
      %p116 = por %p114, %p115
      %p117 = scmp.ne.s32.totalorder %s108, %s109
      %p118 = scmp.eq.s32.totalorder %s18, 0
      %p119 = por %p117, %p118
      %p120 = scmp.ne.s32.totalorder %s108, %s109
      %p121 = scmp.eq.s32.totalorder %s19, 1
      %p122 = por %p120, %p121
      %p124 = scmp.ne.s32.totalorder %s109, %s123
      %p125 = scmp.eq.s32.totalorder %s19, 0
      %p126 = por %p124, %p125
      %s127 = ssub.s32 %s20, %s32
      %s128 = ssub.s32 %s21, %s28
      %s129 = sor.u32 %s127, %s128
      %p130 = scmp.eq.s32.totalorder %s129, 0
      %s132 = sadd.s32 %s131, 1
      %s133 = scalar_select %p130, %s131, %s132
      %p136 = pneg %p130
      %p137 = scmp.eq.s32.totalorder %s13, 1
      %p138 = por %p136, %p137
      %p139 = scmp.ne.s32.totalorder %s131, %s134
      %p140 = scmp.eq.s32.totalorder %s13, 0
      %p141 = por %p139, %p140
      %p142 = scmp.ne.s32.totalorder %s131, %s134
      %p143 = scmp.eq.s32.totalorder %s18, 1
      %p144 = por %p142, %p143
      %p145 = scmp.ne.s32.totalorder %s134, %s135
      %p146 = scmp.eq.s32.totalorder %s18, 0
      %p147 = por %p145, %p146
      %p148 = scmp.ne.s32.totalorder %s134, %s135
      %p149 = scmp.eq.s32.totalorder %s19, 1
      %p150 = por %p148, %p149
      %p152 = scmp.ne.s32.totalorder %s135, %s151
      %p153 = scmp.eq.s32.totalorder %s19, 0
      %p154 = por %p152, %p153
      %p155 = scmp.le.s32.totalorder 1, %s13
      %p156 = scmp.lt.s32.totalorder %s13, 3
      %p157 = pnand %p155, %p156
      %p158 = pneg %p157
      // Predicated region
      $region9: #{tpu_custom_call.1} parent=5 // pred_check
        _
      $region10: #{tpu_custom_call.1} parent=5 // pred_check_branch
        %160 = sbr.rel (%p157) target = $region12
      $region11: #{tpu_custom_call.1} parent=5 // pred_region
        %s161 = ssub.s32 %s13, 1
        // Predicated region
        $region13: #{tpu_custom_call.1} parent=11 // pred_check
          %p162 = pneg %p72
        $region14: #{tpu_custom_call.1} parent=11 // pred_check_branch
          %164 = sbr.rel (%p162) target = $region16
        $region15: #{tpu_custom_call.1} parent=11 // pred_region
          _
        $region16: #{tpu_custom_call.1} parent=11 // pred_fallthru
          _
        // Predicated region
        $region17: #{tpu_custom_call.1} parent=11 // pred_check
          %p165 = pneg %p98
        $region18: #{tpu_custom_call.1} parent=11 // pred_check_branch
          %167 = sbr.rel (%p165) target = $region20
        $region19: #{tpu_custom_call.1} parent=11 // pred_region
          %p168 = scmp.lt.s32.totalorder %s23, 0
          %s169 = scalar_select %p168, %s23, 0
          %s170 = smul.addr %s169, 8
          %s171 = scalar_lea.vmem %s2, %s170
        $region20: #{tpu_custom_call.1} parent=11 // pred_fallthru
          _
        // Predicated region
        $region21: #{tpu_custom_call.1} parent=11 // pred_check
          %p172 = pneg %p119
        $region22: #{tpu_custom_call.1} parent=11 // pred_check_branch
          %174 = sbr.rel (%p172) target = $region24
        $region23: #{tpu_custom_call.1} parent=11 // pred_region
          _
        $region24: #{tpu_custom_call.1} parent=11 // pred_fallthru
          _
      $region12: #{tpu_custom_call.1} parent=5 // pred_fallthru
        _
      %p175 = scmp.lt.s32.totalorder %s13, 2
      // Predicated region
      $region25: #{tpu_custom_call.1} parent=5 // pred_check
        %p176 = pneg %p175
      $region26: #{tpu_custom_call.1} parent=5 // pred_check_branch
        %178 = sbr.rel (%p176) target = $region28
      $region27: #{tpu_custom_call.1} parent=5 // pred_region
        // Predicated region
        $region29: #{tpu_custom_call.1} parent=27 // pred_check
          %p179 = pneg %p45
        $region30: #{tpu_custom_call.1} parent=27 // pred_check_branch
          %181 = sbr.rel (%p179) target = $region32
        $region31: #{tpu_custom_call.1} parent=27 // pred_region
          %p182 = scmp.lt.s32.totalorder %s20, 1
          %s183 = scalar_select %p182, %s20, 1
          %s184 = smul.addr %s183, 8
          %s185 = scalar_lea.vmem %s0, %s184
        $region32: #{tpu_custom_call.1} parent=27 // pred_fallthru
          _
      $region28: #{tpu_custom_call.1} parent=5 // pred_fallthru
        _
      %p186 = scmp.le.s32.totalorder 1, %s13
      %p187 = scmp.lt.s32.totalorder %s13, 3
      %p188 = pnand %p186, %p187
      %p189 = pneg %p188
      // Predicated region
      $region33: #{tpu_custom_call.1} parent=5 // pred_check
        _
      $region34: #{tpu_custom_call.1} parent=5 // pred_check_branch
        %191 = sbr.rel (%p188) target = $region36
      $region35: #{tpu_custom_call.1} parent=5 // pred_region
        %s192 = ssub.s32 %s13, 1
        %p193 = scmp.lt.s32.totalorder %s22, 1
        %s194 = scalar_select %p193, %s22, 1
        %s195 = smul.addr %s194, 8
        %s196 = scalar_lea.vmem %s0, %s195
        %p197 = pneg %p51
        %p198 = pneg %p48
        %p199 = pneg %p72
        %p200 = pneg %p69
        %p201 = scmp.lt.s32.totalorder %s23, 0
        %s202 = scalar_select %p201, %s23, 0
        %s203 = smul.addr %s202, 8
        %s204 = scalar_lea.vmem %s2, %s203
        %p205 = pneg %p98
        %p206 = pneg %p95
        %p207 = pneg %p119
        %p208 = pneg %p116
        %p209 = pneg %p147
        %p210 = pneg %p144
        %s211 = sand.u32 %s134, 1
        %s212 = scalar_lea.sflag [#allocation4], %s211
        %s213 = sand.u32 %s134, 1
        %s214 = smul.addr %s213, 8
        %s215 = scalar_lea.vmem [#allocation3], %s214
        %p216 = scmp.lt.s32.totalorder %s22, 1
        %s217 = scalar_select %p216, %s22, 1
        %s218 = smul.addr %s217, 8
        %s219 = scalar_lea.vmem %s0, %s218
        %p220 = scmp.lt.s32.totalorder %s23, 0
        %s221 = scalar_select %p220, %s23, 0
        %s222 = smul.addr %s221, 8
        %s223 = scalar_lea.vmem %s2, %s222
        %p224 = scmp.eq.s32.totalorder %s23, 0
        // Predicated region
        $region37: #{tpu_custom_call.1} parent=35 // pred_check
          %p225 = pneg %p224
        $region38: #{tpu_custom_call.1} parent=35 // pred_check_branch
          %227 = sbr.rel (%p225) target = $region40
        $region39: #{tpu_custom_call.1} parent=35 // pred_region
          %v228 = vld [vmem:[%s219] sm:$0xff]
          %v229 = vld [vmem:[%s1] sm:$0xf]
          %vm230 = vcmask 31744
          %v232 = vsel %vm230, %v228, 0
          %vm234 = vcmask 1043456
          %v236 = vsel %vm234, %v229, 0
          %238 = vmatprep.subr.mxu0 0.0
          %239 = vmatpush1.msra.mxu0 %v236
          %240 = vmatprep.subr.mxu0 0.0
          %241 = vmatpush1.msra.mxu0 0.0
          %242 = vmatprep.subr.mxu0 0.0
          %243 = vmatpush1.msra.mxu0 0.0
          %244 = vmatprep.subr.mxu0 0.0
          %245 = vmatpush1.msra.mxu0 0.0
          %246 = vmatprep.subr.mxu0 0.0
          %247 = vmatpush1.msra.mxu0 0.0
          %248 = vmatprep.subr.mxu0 0.0
          %249 = vmatpush1.msra.mxu0 0.0
          %250 = vmatprep.subr.mxu0 0.0
          %251 = vmatpush1.msra.mxu0 0.0
          %252 = vmatprep.subr.mxu0 0.0
          %253 = vmatpush1.msra.mxu0 0.0
          %254 = vmatprep.subr.mxu0 0.0
          %255 = vmatpush1.msra.mxu0 0.0
          %256 = vmatprep.subr.mxu0 0.0
          %257 = vmatpush1.msra.mxu0 0.0
          %258 = vmatprep.subr.mxu0 0.0
          %259 = vmatpush1.msra.mxu0 0.0
          %260 = vmatprep.subr.mxu0 0.0
          %261 = vmatpush1.msra.mxu0 0.0
          %262 = vmatprep.subr.mxu0 0.0
          %263 = vmatpush1.msra.mxu0 0.0
          %264 = vmatprep.subr.mxu0 0.0
          %265 = vmatpush1.msra.mxu0 0.0
          %266 = vmatprep.subr.mxu0 0.0
          %267 = vmatpush1.msra.mxu0 0.0
          %268 = vmatprep.subr.mxu0 0.0
          %269 = vmatpush1.msra.mxu0 0.0
          %270 = vmatprep.subr.mxu0 0.0
          %271 = vmatpush1.msra.mxu0 0.0
          %272 = vmatprep.subr.mxu0 0.0
          %273 = vmatpush1.msra.mxu0 0.0
          %274 = vmatprep.subr.mxu0 0.0
          %275 = vmatpush1.msra.mxu0 0.0
          %276 = vmatprep.subr.mxu0 0.0
          %277 = vmatpush1.msra.mxu0 0.0
          %278 = vmatprep.subr.mxu0 0.0
          %279 = vmatpush1.msra.mxu0 0.0
          %280 = vmatprep.subr.mxu0 0.0
          %281 = vmatpush1.msra.mxu0 0.0
          %282 = vmatprep.subr.mxu0 0.0
          %283 = vmatpush1.msra.mxu0 0.0
          %284 = vmatprep.subr.mxu0 0.0
          %285 = vmatpush1.msra.mxu0 0.0
          %286 = vmatprep.subr.mxu0 0.0
          %287 = vmatpush1.msra.mxu0 0.0
          %288 = vmatprep.subr.mxu0 0.0
          %289 = vmatpush1.msra.mxu0 0.0
          %290 = vmatprep.subr.mxu0 0.0
          %291 = vmatpush1.msra.mxu0 0.0
          %292 = vmatprep.subr.mxu0 0.0
          %293 = vmatpush1.msra.mxu0 0.0
          %294 = vmatprep.subr.mxu0 0.0
          %295 = vmatpush1.msra.mxu0 0.0
          %296 = vmatprep.subr.mxu0 0.0
          %297 = vmatpush1.msra.mxu0 0.0
          %298 = vmatprep.subr.mxu0 0.0
          %299 = vmatpush1.msra.mxu0 0.0
          %300 = vmatprep.subr.mxu0 0.0
          %301 = vmatpush1.msra.mxu0 0.0
          %302 = vmatprep.mubr.f32.mxu0 0.0
          %303 = vmatmul.mubr.f32.gmra.mrb[0].mxu0 %v232
          %v304 = vpop.f32.mrb[0].mxu0
          %v305 = vadd.f32 0.0, %v304
          %v306 = vpop.f32.mrb[0].mxu0
          %307 = vdwg.mxu0
          %308 = vst [vmem:[#allocation2] sm:$0xff] %v305
        $region40: #{tpu_custom_call.1} parent=35 // pred_fallthru
          _
        %v309 = vld [vmem:[#allocation2] sm:$0xff]
        %s310 = smul.u32 %s23, 8
        %s311 = scalar_lea.vmem [#allocation2], %s310
        %v312 = vld [vmem:[%s311] sm:$0xff]
        %313 = vmatprep.subr.mxu0 0.0
        %314 = vmatpush1.xpose.msra.mxu0 %v309
        %315 = vmatprep.subr.mxu0 0.0
        %316 = vmatpush1.xpose.msra.mxu0 0.0
        %317 = vmatprep.subr.mxu0 0.0
        %318 = vmatpush1.xpose.msra.mxu0 0.0
        %319 = vmatprep.subr.mxu0 0.0
        %320 = vmatpush1.xpose.msra.mxu0 0.0
        %321 = vmatprep.subr.mxu0 0.0
        %322 = vmatpush1.xpose.msra.mxu0 0.0
        %323 = vmatprep.subr.mxu0 0.0
        %324 = vmatpush1.xpose.msra.mxu0 0.0
        %325 = vmatprep.subr.mxu0 0.0
        %326 = vmatpush1.xpose.msra.mxu0 0.0
        %327 = vmatprep.subr.mxu0 0.0
        %328 = vmatpush1.xpose.msra.mxu0 0.0
        %329 = vmatprep.subr.mxu0 0.0
        %330 = vmatpush1.xpose.msra.mxu0 0.0
        %331 = vmatprep.subr.mxu0 0.0
        %332 = vmatpush1.xpose.msra.mxu0 0.0
        %333 = vmatprep.subr.mxu0 0.0
        %334 = vmatpush1.xpose.msra.mxu0 0.0
        %335 = vmatprep.subr.mxu0 0.0
        %336 = vmatpush1.xpose.msra.mxu0 0.0
        %337 = vmatprep.subr.mxu0 0.0
        %338 = vmatpush1.xpose.msra.mxu0 0.0
        %339 = vmatprep.subr.mxu0 0.0
        %340 = vmatpush1.xpose.msra.mxu0 0.0
        %341 = vmatprep.subr.mxu0 0.0
        %342 = vmatpush1.xpose.msra.mxu0 0.0
        %343 = vmatprep.subr.mxu0 0.0
        %344 = vmatpush1.xpose.msra.mxu0 0.0
        %345 = vmatprep.subr.mxu0 0.0
        %346 = vmatpush1.xpose.msra.mxu0 0.0
        %347 = vmatprep.subr.mxu0 0.0
        %348 = vmatpush1.xpose.msra.mxu0 0.0
        %349 = vmatprep.subr.mxu0 0.0
        %350 = vmatpush1.xpose.msra.mxu0 0.0
        %351 = vmatprep.subr.mxu0 0.0
        %352 = vmatpush1.xpose.msra.mxu0 0.0
        %353 = vmatprep.subr.mxu0 0.0
        %354 = vmatpush1.xpose.msra.mxu0 0.0
        %355 = vmatprep.subr.mxu0 0.0
        %356 = vmatpush1.xpose.msra.mxu0 0.0
        %357 = vmatprep.subr.mxu0 0.0
        %358 = vmatpush1.xpose.msra.mxu0 0.0
        %359 = vmatprep.subr.mxu0 0.0
        %360 = vmatpush1.xpose.msra.mxu0 0.0
        %361 = vmatprep.subr.mxu0 0.0
        %362 = vmatpush1.xpose.msra.mxu0 0.0
        %363 = vmatprep.subr.mxu0 0.0
        %364 = vmatpush1.xpose.msra.mxu0 0.0
        %365 = vmatprep.subr.mxu0 0.0
        %366 = vmatpush1.xpose.msra.mxu0 0.0
        %367 = vmatprep.subr.mxu0 0.0
        %368 = vmatpush1.xpose.msra.mxu0 0.0
        %369 = vmatprep.subr.mxu0 0.0
        %370 = vmatpush1.xpose.msra.mxu0 0.0
        %371 = vmatprep.subr.mxu0 0.0
        %372 = vmatpush1.xpose.msra.mxu0 0.0
        %373 = vmatprep.subr.mxu0 0.0
        %374 = vmatpush1.xpose.msra.mxu0 0.0
        %375 = vmatprep.subr.mxu0 0.0
        %376 = vmatpush1.xpose.msra.mxu0 0.0
        %377 = vmatprep.mubr.f32.mxu0 0.0
        %378 = vmatmul.mubr.f32.gmra.mrb[0].mxu0 %v312
        %v379 = vpop.f32.mrb[0].mxu0
        %v380 = vadd.f32 0.0, %v379
        %v381 = vpop.f32.mrb[0].mxu0
        %382 = vdwg.mxu0
        %v383 = vld [vmem:[%s223] sm:$0xff]
        %v384 = vmul.f32 %v380, %v383
        %vm385 = vcmp.eq.f32.partialorder %v384, 0.0
        %v386 = vsel %vm385, -1e+16, %v384
        %vm387 = vcmask 64512
        %v388 = vsel %vm387, %v386, -inf
        %389 = vmax.xlane.f32.xlu0 %v388
        %v390 = vpop.xlane.xlu0 %389
        %v391 = vsub.f32 %v386, %v390
        %v392 = vmul.f32 %v391, 1.442695
        %v393 = vpow.pop %v392
        %v394 = vsel %vm387, %v393, 0.0
        %395 = vadd.xlane.f32.xlu0 %v394
        %v396 = vpop.xlane.xlu0 %395
        %v397 = vrcp.pop %v396
        %v398 = vmul.f32 %v393, %v397
        %v399 = vld [vmem:[%s3] sm:$0x1]
        %v401 = vlaneseq
        %v402 = vshrl.u32 %v401, 7
        %v403 = vsub.s32 0, %v402
        %v404 = vrot.slane %v399, %v403
        %v407 = vsel %vm387, %v398, 0
        %409 = vmatprep.subr.mxu0 0.0
        %410 = vmatpush1.msra.mxu0 %v309
        %411 = vmatprep.subr.mxu0 0.0
        %412 = vmatpush1.msra.mxu0 0.0
        %413 = vmatprep.subr.mxu0 0.0
        %414 = vmatpush1.msra.mxu0 0.0
        %415 = vmatprep.subr.mxu0 0.0
        %416 = vmatpush1.msra.mxu0 0.0
        %417 = vmatprep.subr.mxu0 0.0
        %418 = vmatpush1.msra.mxu0 0.0
        %419 = vmatprep.subr.mxu0 0.0
        %420 = vmatpush1.msra.mxu0 0.0
        %421 = vmatprep.subr.mxu0 0.0
        %422 = vmatpush1.msra.mxu0 0.0
        %423 = vmatprep.subr.mxu0 0.0
        %424 = vmatpush1.msra.mxu0 0.0
        %425 = vmatprep.subr.mxu0 0.0
        %426 = vmatpush1.msra.mxu0 0.0
        %427 = vmatprep.subr.mxu0 0.0
        %428 = vmatpush1.msra.mxu0 0.0
        %429 = vmatprep.subr.mxu0 0.0
        %430 = vmatpush1.msra.mxu0 0.0
        %431 = vmatprep.subr.mxu0 0.0
        %432 = vmatpush1.msra.mxu0 0.0
        %433 = vmatprep.subr.mxu0 0.0
        %434 = vmatpush1.msra.mxu0 0.0
        %435 = vmatprep.subr.mxu0 0.0
        %436 = vmatpush1.msra.mxu0 0.0
        %437 = vmatprep.subr.mxu0 0.0
        %438 = vmatpush1.msra.mxu0 0.0
        %439 = vmatprep.subr.mxu0 0.0
        %440 = vmatpush1.msra.mxu0 0.0
        %441 = vmatprep.subr.mxu0 0.0
        %442 = vmatpush1.msra.mxu0 0.0
        %443 = vmatprep.subr.mxu0 0.0
        %444 = vmatpush1.msra.mxu0 0.0
        %445 = vmatprep.subr.mxu0 0.0
        %446 = vmatpush1.msra.mxu0 0.0
        %447 = vmatprep.subr.mxu0 0.0
        %448 = vmatpush1.msra.mxu0 0.0
        %449 = vmatprep.subr.mxu0 0.0
        %450 = vmatpush1.msra.mxu0 0.0
        %451 = vmatprep.subr.mxu0 0.0
        %452 = vmatpush1.msra.mxu0 0.0
        %453 = vmatprep.subr.mxu0 0.0
        %454 = vmatpush1.msra.mxu0 0.0
        %455 = vmatprep.subr.mxu0 0.0
        %456 = vmatpush1.msra.mxu0 0.0
        %457 = vmatprep.subr.mxu0 0.0
        %458 = vmatpush1.msra.mxu0 0.0
        %459 = vmatprep.subr.mxu0 0.0
        %460 = vmatpush1.msra.mxu0 0.0
        %461 = vmatprep.subr.mxu0 0.0
        %462 = vmatpush1.msra.mxu0 0.0
        %463 = vmatprep.subr.mxu0 0.0
        %464 = vmatpush1.msra.mxu0 0.0
        %465 = vmatprep.subr.mxu0 0.0
        %466 = vmatpush1.msra.mxu0 0.0
        %467 = vmatprep.subr.mxu0 0.0
        %468 = vmatpush1.msra.mxu0 0.0
        %469 = vmatprep.subr.mxu0 0.0
        %470 = vmatpush1.msra.mxu0 0.0
        %471 = vmatprep.subr.mxu0 0.0
        %472 = vmatpush1.msra.mxu0 0.0
        %473 = vmatprep.mubr.f32.mxu0 0.0
        %474 = vmatmul.mubr.f32.gmra.mrb[0].mxu0 %v407
        %v475 = vpop.f32.mrb[0].mxu0
        %v476 = vadd.f32 %v404, %v475
        %v477 = vpop.f32.mrb[0].mxu0
        %478 = vdwg.mxu0
        %479 = vst [vmem:[%s215] sm:$0xff] %v476
        %s480 = sand.u32 %s134, 1
        %s481 = scalar_lea.sflag [#allocation4], %s480
        %s482 = sand.u32 %s134, 1
        %s483 = smul.addr %s482, 8
        %s484 = scalar_lea.vmem [#allocation3], %s483
        // Predicated region
        $region41: #{tpu_custom_call.1} parent=35 // pred_check
          %p485 = pneg %p144
        $region42: #{tpu_custom_call.1} parent=35 // pred_check_branch
          %487 = sbr.rel (%p485) target = $region44
        $region43: #{tpu_custom_call.1} parent=35 // pred_region
          %s489 = ssub.s32 128, 128
          %490 = vsyncadd %s481, %s489
          %s491 = sadd.s32 %s23, %s22
          %s492 = smul.addr %s491, 128
          %s493 = scalar_lea.hbm %s4, %s492
          %s495 = sshll.u32 %s484, 4
          %s496 = int_to_ptr.vmem [resolvable:$true] %s495
          %498 = dma.vmem_to_hbm [thread:$0]  %s496, 128, %s493, %s481
        $region44: #{tpu_custom_call.1} parent=35 // pred_fallthru
          _
      $region36: #{tpu_custom_call.1} parent=5 // pred_fallthru
        _
      %p499 = scmp.le.s32.totalorder 2, %s13
      // Predicated region
      $region45: #{tpu_custom_call.1} parent=5 // pred_check
        %p500 = pneg %p499
      $region46: #{tpu_custom_call.1} parent=5 // pred_check_branch
        %502 = sbr.rel (%p500) target = $region48
      $region47: #{tpu_custom_call.1} parent=5 // pred_region
        %s503 = ssub.s32 %s13, 2
        // Predicated region
        $region49: #{tpu_custom_call.1} parent=47 // pred_check
          %p504 = pneg %p150
        $region50: #{tpu_custom_call.1} parent=47 // pred_check_branch
          %506 = sbr.rel (%p504) target = $region52
        $region51: #{tpu_custom_call.1} parent=47 // pred_region
          %s507 = sand.u32 %s135, 1
          %s508 = scalar_lea.sflag [#allocation4], %s507
          %s509 = sand.u32 %s135, 1
          %s510 = smul.addr %s509, 8
          %s511 = scalar_lea.vmem [#allocation3], %s510
          %512 = dma.done %s508, 128
        $region52: #{tpu_custom_call.1} parent=47 // pred_fallthru
          _
      $region48: #{tpu_custom_call.1} parent=5 // pred_fallthru
        _
    $region6: #{tpu_custom_call.1} parent=1 // loop_footer
      %s17 = sadd.s32 1, %s13
    $region7: #{tpu_custom_call.1} parent=1 // loop_footer_branch
      %12 = sbr.rel target = $region3
    $region8: #{tpu_custom_call.1} parent=1 // loop_exit
      _
    %513 = vsyncpa [#allocation4], 1
    %s514 = scalar_lea.sflag [#allocation4], 1
    %515 = vsyncpa %s514, 1

</llo_original>
